<compile_context>
chip_gen: v6e
topology: v6e:2x2x1
jax: 0.10.0
libtpu: 0.0.40
codegen_flags: <defaults>
</compile_context>

<pallas_src>
import math

import jax
import jax.numpy as jnp
from jax import lax
from jax.experimental import pallas as pl
from jax.experimental.pallas import tpu as pltpu

LANE = 128     # lane tile width (embed axis)
SUBLANE = 8    # sublane granularity (time axis)


def _round_up(v, m):
    return ((v + m - 1) // m) * m


def ema_kernel(x_ref, q_ref, a_ref, omega_ref, o_ref):
    """Causal EMA recurrence + residual + SiLU for one (batch, 128-lane D chunk).

    x_ref:     (1, Lp, 128)  input tile (time on sublanes, embed on lanes)
    q_ref:     (N, 128)      per-state decay      q = 1 - sigmoid(delta)*sigmoid(alpha)
    a_ref:     (N, 128)      per-state out weight A = sigmoid(delta)*beta*gamma*scale
    omega_ref: (1, 128)      residual scale
    o_ref:     (1, Lp, 128)  output tile
    """
    x = x_ref[0]                        # (Lp, 128) f32
    qmat = q_ref[...]                   # (N, 128)
    amat = a_ref[...]                   # (N, 128)
    lp = x.shape[0]
    nstates = qmat.shape[0]

    # Time (sublane) index, hoisted and reused by every scan step.
    row = lax.broadcasted_iota(jnp.int32, x.shape, 0)

    y = jnp.zeros_like(x)
    for n in range(nstates):            # static, small (ndim ~ 2-4)
        # Hillis-Steele inclusive scan of h[t] = q*h[t-1] + x[t] along sublanes.
        # Carry pairs (decay, h); combine(prev, cur) = (a_p*a_c, a_c*b_p + b_c).
        decay = jnp.broadcast_to(qmat[n:n + 1, :], x.shape)
        h = x
        shift = 1
        while shift < lp:               # static unroll: ceil(log2(Lp)) steps
            valid = row >= shift        # rows t < shift combine with identity
            h_prev = pltpu.roll(h, shift=shift, axis=0)
            h = decay * jnp.where(valid, h_prev, 0.0) + h
            if shift * 2 < lp:          # decay is dead after the final step
                d_prev = pltpu.roll(decay, shift=shift, axis=0)
                decay = decay * jnp.where(valid, d_prev, 1.0)
            shift *= 2
        y = y + amat[n:n + 1, :] * h

    out = y + x * omega_ref[...]        # residual
    o_ref[0] = out * jax.nn.sigmoid(out)   # SiLU


def multi_head_ema_forward(x, delta, alpha, beta, gamma, omega, ndim):
    """Equivalent of MultiHeadEMA.forward(x, padding_mask=None)."""
    # TODO(synk): padding_mask / bidirectional / truncation branches not
    # implemented (module defaults None / False / None are assumed).
    B, L, D = x.shape
    x = x.astype(jnp.float32)

    # --- O(N*D) parameter setup (no (L,L,D) or (L,D) kernel materialization) ---
    scale = math.sqrt(1.0 / ndim)
    p = jax.nn.sigmoid(delta.astype(jnp.float32))[..., 0]              # (D, N)
    q = 1.0 - p * jax.nn.sigmoid(alpha.astype(jnp.float32))[..., 0]    # (D, N)
    a_out = (p * beta.astype(jnp.float32)[..., 0]
             * gamma.astype(jnp.float32) * scale)                      # (D, N)

    # --- pad: lane-dense D (mult of 128), sublane-aligned L (mult of 8) ---
    Dp = max(LANE, _round_up(D, LANE))
    Lp = max(SUBLANE, _round_up(L, SUBLANE))
    x_p = jnp.pad(x, ((0, 0), (0, Lp - L), (0, Dp - D)))
    q_p = jnp.pad(q.T, ((0, 0), (0, Dp - D)))                          # (N, Dp)
    a_p = jnp.pad(a_out.T, ((0, 0), (0, Dp - D)))                      # (N, Dp)
    w_p = jnp.pad(omega.reshape(1, D).astype(jnp.float32),
                  ((0, 0), (0, Dp - D)))                               # (1, Dp)

    n_dchunks = Dp // LANE
    # TODO(synk): for very long sequences (Lp beyond ~16K on v7x's 64 MiB VMEM)
    # add a third, "arbitrary" time-chunk grid axis carrying the (N, 128) EMA
    # state in VMEM scratch instead of holding the full sequence per step.
    out = pl.pallas_call(
        ema_kernel,
        out_shape=jax.ShapeDtypeStruct((B, Lp, Dp), jnp.float32),
        grid_spec=pltpu.PrefetchScalarGridSpec(
            num_scalar_prefetch=0,
            grid=(n_dchunks, B),
            in_specs=[
                pl.BlockSpec((1, Lp, LANE), lambda d, b: (b, 0, d)),
                pl.BlockSpec((q_p.shape[0], LANE), lambda d, b: (0, d)),
                pl.BlockSpec((a_p.shape[0], LANE), lambda d, b: (0, d)),
                pl.BlockSpec((1, LANE), lambda d, b: (0, d)),
            ],
            out_specs=pl.BlockSpec((1, Lp, LANE), lambda d, b: (b, 0, d)),
        ),
        compiler_params=pltpu.CompilerParams(
            dimension_semantics=("parallel", "parallel"),
            vmem_limit_bytes=32 * 1024 * 1024,
        ),
    )(x_p, q_p, a_p, w_p)
    return out[:, :L, :D]


# ----------------------------- verification ---------------------------------

def _compute_ema_kernel(delta, alpha, beta, gamma, length, ndim):
    """EMA impulse response k of shape (D, L) — used only by the FFT reference."""
    scale = math.sqrt(1.0 / ndim)
    p = jax.nn.sigmoid(delta)
    a = jax.nn.sigmoid(alpha)
    q = 1.0 - p * a
    vander = jnp.arange(length, dtype=jnp.float32)[None, None, :] * jnp.log(q)
    kern = p * beta * jnp.exp(vander)
    return jnp.einsum('dnl,dn->dl', kern, gamma * scale)


def reference_forward(x, delta, alpha, beta, gamma, omega, ndim):
    """Pure-JAX replica of the PyTorch forward (FFT path)."""
    B, L, D = x.shape
    residual = x * omega
    xt = jnp.transpose(x, (0, 2, 1))                                   # (B, D, L)
    k = _compute_ema_kernel(delta, alpha, beta, gamma, L, ndim)        # (D, L)
    k_f = jnp.fft.rfft(k, n=2 * L)
    x_f = jnp.fft.rfft(xt, n=2 * L)
    out = jnp.fft.irfft(x_f * k_f, n=2 * L)[..., :L]
    out = jnp.transpose(out, (0, 2, 1)) + residual
    return out * jax.nn.sigmoid(out)                                   # SiLU


def _init_params(key, embed_dim, ndim):
    """Mirrors MultiHeadEMA.reset_parameters()."""
    k1, k2, k3, k4, k5 = jax.random.split(key, 5)
    delta = 0.2 * jax.random.normal(k1, (embed_dim, ndim, 1), jnp.float32)
    alpha = 0.2 * jax.random.normal(k2, (embed_dim, ndim, 1), jnp.float32)
    val = jnp.ones((ndim, 1), jnp.float32).at[1::2].set(-1.0)
    beta = 0.02 * jax.random.normal(k3, (embed_dim, ndim, 1), jnp.float32) + val
    gamma = jax.random.normal(k4, (embed_dim, ndim), jnp.float32)
    omega = jax.random.normal(k5, (embed_dim,), jnp.float32)
    return delta, alpha, beta, gamma, omega


def _run_case(key, batch, seq_len, embed_dim, ndim, atol):
    kp, kx = jax.random.split(key)
    delta, alpha, beta, gamma, omega = _init_params(kp, embed_dim, ndim)
    x = jax.random.normal(kx, (batch, seq_len, embed_dim), jnp.float32)

    out = multi_head_ema_forward(x, delta, alpha, beta, gamma, omega, ndim)
    out = jax.block_until_ready(out)

    ref = reference_forward(x, delta, alpha, beta, gamma, omega, ndim)
    max_err = float(jnp.max(jnp.abs(out - ref)))
    assert jnp.allclose(out, ref, rtol=1e-4, atol=atol), (
        f"case B={batch} L={seq_len} D={embed_dim} N={ndim}: max_err={max_err}")


if __name__ == "__main__":
    key = jax.random.PRNGKey(0)
    k1, k2 = jax.random.split(key)
    # Small canonical shape.
    _run_case(k1, batch=2, seq_len=16, embed_dim=32, ndim=2, atol=1e-4)
    # Larger case: L not a multiple of 8 (sublane padding), D spanning two
    # 128-lane chunks (multi d-chunk grid), odd state count.
    _run_case(k2, batch=2, seq_len=37, embed_dim=192, ndim=3, atol=2e-4)
    print("KERNEL_OK")
</pallas_src>

<mosaic_0001>
module attributes {stable_mosaic.version = 11 : i64} {
  func.func @ema_kernel(%arg0: i32, %arg1: i32, %arg2: memref<1x16x128xf32, #tpu.memory_space<vmem>>, %arg3: memref<2x128xf32, #tpu.memory_space<vmem>>, %arg4: memref<2x128xf32, #tpu.memory_space<vmem>>, %arg5: memref<1x128xf32, #tpu.memory_space<vmem>>, %arg6: memref<1x16x128xf32, #tpu.memory_space<vmem>>) attributes {dimension_semantics = [#tpu.dimension_semantics<parallel>, #tpu.dimension_semantics<parallel>], iteration_bounds = array<i64: 1, 2>, scalar_prefetch = 0 : i64, scratch_operands = 0 : i64, tpu.core_type = #tpu.core_type<tc>, window_params = [{transform_indices = @transform_0, window_bounds = array<i64: 1, 16, 128>}, {transform_indices = @transform_1, window_bounds = array<i64: 2, 128>}, {transform_indices = @transform_2, window_bounds = array<i64: 2, 128>}, {transform_indices = @transform_3, window_bounds = array<i64: 1, 128>}, {transform_indices = @transform_4, window_bounds = array<i64: 1, 16, 128>}]} {
    %c0 = arith.constant 0 : index
    %c0_0 = arith.constant 0 : index
    %c0_1 = arith.constant 0 : index
    %0 = vector.load %arg2[%c0, %c0_0, %c0_1] : memref<1x16x128xf32, #tpu.memory_space<vmem>>, vector<1x16x128xf32>
    %1 = vector.shape_cast %0 : vector<1x16x128xf32> to vector<16x128xf32>
    %c0_2 = arith.constant 0 : index
    %c0_3 = arith.constant 0 : index
    %2 = vector.load %arg3[%c0_2, %c0_3] : memref<2x128xf32, #tpu.memory_space<vmem>>, vector<2x128xf32>
    %c0_4 = arith.constant 0 : index
    %c0_5 = arith.constant 0 : index
    %3 = vector.load %arg4[%c0_4, %c0_5] : memref<2x128xf32, #tpu.memory_space<vmem>>, vector<2x128xf32>
    %4 = tpu.iota {dimensions = array<i32: 0>} : vector<16x128xi32>
    %cst = arith.constant 0.000000e+00 : f32
    %5 = vector.broadcast %cst : f32 to vector<16x128xf32>
    %6 = vector.extract_strided_slice %2 {offsets = [0, 0], sizes = [1, 128], strides = [1, 1]} : vector<2x128xf32> to vector<1x128xf32>
    %7 = vector.shape_cast %6 : vector<1x128xf32> to vector<1x128xf32>
    %8 = vector.broadcast %7 : vector<1x128xf32> to vector<16x128xf32>
    %c1_i32 = arith.constant 1 : i32
    %9 = vector.broadcast %c1_i32 : i32 to vector<16x128xi32>
    %10 = arith.cmpi sge, %4, %9 : vector<16x128xi32>
    %c1_i32_6 = arith.constant 1 : i32
    %11 = tpu.dynamic_rotate %1 by %c1_i32_6 dim 0 : vector<16x128xf32>, i32 -> vector<16x128xf32>
    %cst_7 = arith.constant 0.000000e+00 : f32
    %12 = vector.broadcast %cst_7 : f32 to vector<16x128xf32>
    %13 = arith.select %10, %11, %12 : vector<16x128xi1>, vector<16x128xf32>
    %14 = arith.mulf %8, %13 : vector<16x128xf32>
    %15 = arith.addf %14, %1 : vector<16x128xf32>
    %c1_i32_8 = arith.constant 1 : i32
    %16 = tpu.dynamic_rotate %8 by %c1_i32_8 dim 0 : vector<16x128xf32>, i32 -> vector<16x128xf32>
    %cst_9 = arith.constant 1.000000e+00 : f32
    %17 = vector.broadcast %cst_9 : f32 to vector<16x128xf32>
    %18 = arith.select %10, %16, %17 : vector<16x128xi1>, vector<16x128xf32>
    %19 = arith.mulf %8, %18 : vector<16x128xf32>
    %c2_i32 = arith.constant 2 : i32
    %20 = vector.broadcast %c2_i32 : i32 to vector<16x128xi32>
    %21 = arith.cmpi sge, %4, %20 : vector<16x128xi32>
    %c2_i32_10 = arith.constant 2 : i32
    %22 = tpu.dynamic_rotate %15 by %c2_i32_10 dim 0 : vector<16x128xf32>, i32 -> vector<16x128xf32>
    %cst_11 = arith.constant 0.000000e+00 : f32
    %23 = vector.broadcast %cst_11 : f32 to vector<16x128xf32>
    %24 = arith.select %21, %22, %23 : vector<16x128xi1>, vector<16x128xf32>
    %25 = arith.mulf %19, %24 : vector<16x128xf32>
    %26 = arith.addf %25, %15 : vector<16x128xf32>
    %c2_i32_12 = arith.constant 2 : i32
    %27 = tpu.dynamic_rotate %19 by %c2_i32_12 dim 0 : vector<16x128xf32>, i32 -> vector<16x128xf32>
    %cst_13 = arith.constant 1.000000e+00 : f32
    %28 = vector.broadcast %cst_13 : f32 to vector<16x128xf32>
    %29 = arith.select %21, %27, %28 : vector<16x128xi1>, vector<16x128xf32>
    %30 = arith.mulf %19, %29 : vector<16x128xf32>
    %c4_i32 = arith.constant 4 : i32
    %31 = vector.broadcast %c4_i32 : i32 to vector<16x128xi32>
    %32 = arith.cmpi sge, %4, %31 : vector<16x128xi32>
    %c4_i32_14 = arith.constant 4 : i32
    %33 = tpu.dynamic_rotate %26 by %c4_i32_14 dim 0 : vector<16x128xf32>, i32 -> vector<16x128xf32>
    %cst_15 = arith.constant 0.000000e+00 : f32
    %34 = vector.broadcast %cst_15 : f32 to vector<16x128xf32>
    %35 = arith.select %32, %33, %34 : vector<16x128xi1>, vector<16x128xf32>
    %36 = arith.mulf %30, %35 : vector<16x128xf32>
    %37 = arith.addf %36, %26 : vector<16x128xf32>
    %c4_i32_16 = arith.constant 4 : i32
    %38 = tpu.dynamic_rotate %30 by %c4_i32_16 dim 0 : vector<16x128xf32>, i32 -> vector<16x128xf32>
    %cst_17 = arith.constant 1.000000e+00 : f32
    %39 = vector.broadcast %cst_17 : f32 to vector<16x128xf32>
    %40 = arith.select %32, %38, %39 : vector<16x128xi1>, vector<16x128xf32>
    %41 = arith.mulf %30, %40 : vector<16x128xf32>
    %c8_i32 = arith.constant 8 : i32
    %42 = vector.broadcast %c8_i32 : i32 to vector<16x128xi32>
    %43 = arith.cmpi sge, %4, %42 : vector<16x128xi32>
    %c8_i32_18 = arith.constant 8 : i32
    %44 = tpu.dynamic_rotate %37 by %c8_i32_18 dim 0 : vector<16x128xf32>, i32 -> vector<16x128xf32>
    %cst_19 = arith.constant 0.000000e+00 : f32
    %45 = vector.broadcast %cst_19 : f32 to vector<16x128xf32>
    %46 = arith.select %43, %44, %45 : vector<16x128xi1>, vector<16x128xf32>
    %47 = arith.mulf %41, %46 : vector<16x128xf32>
    %48 = arith.addf %47, %37 : vector<16x128xf32>
    %49 = vector.extract_strided_slice %3 {offsets = [0, 0], sizes = [1, 128], strides = [1, 1]} : vector<2x128xf32> to vector<1x128xf32>
    %50 = vector.broadcast %49 : vector<1x128xf32> to vector<16x128xf32>
    %51 = arith.mulf %50, %48 : vector<16x128xf32>
    %52 = arith.addf %5, %51 : vector<16x128xf32>
    %53 = vector.extract_strided_slice %2 {offsets = [1, 0], sizes = [1, 128], strides = [1, 1]} : vector<2x128xf32> to vector<1x128xf32>
    %54 = vector.shape_cast %53 : vector<1x128xf32> to vector<1x128xf32>
    %55 = vector.broadcast %54 : vector<1x128xf32> to vector<16x128xf32>
    %c1_i32_20 = arith.constant 1 : i32
    %56 = vector.broadcast %c1_i32_20 : i32 to vector<16x128xi32>
    %57 = arith.cmpi sge, %4, %56 : vector<16x128xi32>
    %c1_i32_21 = arith.constant 1 : i32
    %58 = tpu.dynamic_rotate %1 by %c1_i32_21 dim 0 : vector<16x128xf32>, i32 -> vector<16x128xf32>
    %cst_22 = arith.constant 0.000000e+00 : f32
    %59 = vector.broadcast %cst_22 : f32 to vector<16x128xf32>
    %60 = arith.select %57, %58, %59 : vector<16x128xi1>, vector<16x128xf32>
    %61 = arith.mulf %55, %60 : vector<16x128xf32>
    %62 = arith.addf %61, %1 : vector<16x128xf32>
    %c1_i32_23 = arith.constant 1 : i32
    %63 = tpu.dynamic_rotate %55 by %c1_i32_23 dim 0 : vector<16x128xf32>, i32 -> vector<16x128xf32>
    %cst_24 = arith.constant 1.000000e+00 : f32
    %64 = vector.broadcast %cst_24 : f32 to vector<16x128xf32>
    %65 = arith.select %57, %63, %64 : vector<16x128xi1>, vector<16x128xf32>
    %66 = arith.mulf %55, %65 : vector<16x128xf32>
    %c2_i32_25 = arith.constant 2 : i32
    %67 = vector.broadcast %c2_i32_25 : i32 to vector<16x128xi32>
    %68 = arith.cmpi sge, %4, %67 : vector<16x128xi32>
    %c2_i32_26 = arith.constant 2 : i32
    %69 = tpu.dynamic_rotate %62 by %c2_i32_26 dim 0 : vector<16x128xf32>, i32 -> vector<16x128xf32>
    %cst_27 = arith.constant 0.000000e+00 : f32
    %70 = vector.broadcast %cst_27 : f32 to vector<16x128xf32>
    %71 = arith.select %68, %69, %70 : vector<16x128xi1>, vector<16x128xf32>
    %72 = arith.mulf %66, %71 : vector<16x128xf32>
    %73 = arith.addf %72, %62 : vector<16x128xf32>
    %c2_i32_28 = arith.constant 2 : i32
    %74 = tpu.dynamic_rotate %66 by %c2_i32_28 dim 0 : vector<16x128xf32>, i32 -> vector<16x128xf32>
    %cst_29 = arith.constant 1.000000e+00 : f32
    %75 = vector.broadcast %cst_29 : f32 to vector<16x128xf32>
    %76 = arith.select %68, %74, %75 : vector<16x128xi1>, vector<16x128xf32>
    %77 = arith.mulf %66, %76 : vector<16x128xf32>
    %c4_i32_30 = arith.constant 4 : i32
    %78 = vector.broadcast %c4_i32_30 : i32 to vector<16x128xi32>
    %79 = arith.cmpi sge, %4, %78 : vector<16x128xi32>
    %c4_i32_31 = arith.constant 4 : i32
    %80 = tpu.dynamic_rotate %73 by %c4_i32_31 dim 0 : vector<16x128xf32>, i32 -> vector<16x128xf32>
    %cst_32 = arith.constant 0.000000e+00 : f32
    %81 = vector.broadcast %cst_32 : f32 to vector<16x128xf32>
    %82 = arith.select %79, %80, %81 : vector<16x128xi1>, vector<16x128xf32>
    %83 = arith.mulf %77, %82 : vector<16x128xf32>
    %84 = arith.addf %83, %73 : vector<16x128xf32>
    %c4_i32_33 = arith.constant 4 : i32
    %85 = tpu.dynamic_rotate %77 by %c4_i32_33 dim 0 : vector<16x128xf32>, i32 -> vector<16x128xf32>
    %cst_34 = arith.constant 1.000000e+00 : f32
    %86 = vector.broadcast %cst_34 : f32 to vector<16x128xf32>
    %87 = arith.select %79, %85, %86 : vector<16x128xi1>, vector<16x128xf32>
    %88 = arith.mulf %77, %87 : vector<16x128xf32>
    %c8_i32_35 = arith.constant 8 : i32
    %89 = vector.broadcast %c8_i32_35 : i32 to vector<16x128xi32>
    %90 = arith.cmpi sge, %4, %89 : vector<16x128xi32>
    %c8_i32_36 = arith.constant 8 : i32
    %91 = tpu.dynamic_rotate %84 by %c8_i32_36 dim 0 : vector<16x128xf32>, i32 -> vector<16x128xf32>
    %cst_37 = arith.constant 0.000000e+00 : f32
    %92 = vector.broadcast %cst_37 : f32 to vector<16x128xf32>
    %93 = arith.select %90, %91, %92 : vector<16x128xi1>, vector<16x128xf32>
    %94 = arith.mulf %88, %93 : vector<16x128xf32>
    %95 = arith.addf %94, %84 : vector<16x128xf32>
    %96 = vector.extract_strided_slice %3 {offsets = [1, 0], sizes = [1, 128], strides = [1, 1]} : vector<2x128xf32> to vector<1x128xf32>
    %97 = vector.broadcast %96 : vector<1x128xf32> to vector<16x128xf32>
    %98 = arith.mulf %97, %95 : vector<16x128xf32>
    %99 = arith.addf %52, %98 : vector<16x128xf32>
    %c0_38 = arith.constant 0 : index
    %c0_39 = arith.constant 0 : index
    %100 = vector.load %arg5[%c0_38, %c0_39] : memref<1x128xf32, #tpu.memory_space<vmem>>, vector<1x128xf32>
    %101 = vector.broadcast %100 : vector<1x128xf32> to vector<16x128xf32>
    %102 = arith.mulf %1, %101 : vector<16x128xf32>
    %103 = arith.addf %99, %102 : vector<16x128xf32>
    %104 = arith.negf %103 : vector<16x128xf32>
    %105 = math.exp %104 : vector<16x128xf32>
    %cst_40 = arith.constant 1.000000e+00 : f32
    %106 = vector.broadcast %cst_40 : f32 to vector<16x128xf32>
    %107 = arith.addf %106, %105 : vector<16x128xf32>
    %108 = arith.divf %106, %107 : vector<16x128xf32>
    %109 = arith.mulf %103, %108 : vector<16x128xf32>
    %c0_41 = arith.constant 0 : index
    %c0_42 = arith.constant 0 : index
    %c0_43 = arith.constant 0 : index
    %110 = vector.load %arg6[%c0_41, %c0_42, %c0_43] : memref<1x16x128xf32, #tpu.memory_space<vmem>>, vector<1x16x128xf32>
    %111 = vector.shape_cast %110 : vector<1x16x128xf32> to vector<16x128xf32>
    %112 = vector.shape_cast %109 : vector<16x128xf32> to vector<1x16x128xf32>
    tpu.vector_store %arg6[%c0_41, %c0_42, %c0_43], %112 {strides = array<i32>} : memref<1x16x128xf32, #tpu.memory_space<vmem>>, vector<1x16x128xf32>,
    return
  }
  func.func @transform_0(%arg0: i32, %arg1: i32) -> (i32, i32, i32) {
    %c0_i32 = arith.constant 0 : i32
    %c0_i32_0 = arith.constant 0 : i32
    return %arg1, %c0_i32, %arg0 : i32, i32, i32
  }
  func.func @transform_1(%arg0: i32, %arg1: i32) -> (i32, i32) {
    %c0_i32 = arith.constant 0 : i32
    %c0_i32_0 = arith.constant 0 : i32
    return %c0_i32, %arg0 : i32, i32
  }
  func.func @transform_2(%arg0: i32, %arg1: i32) -> (i32, i32) {
    %c0_i32 = arith.constant 0 : i32
    %c0_i32_0 = arith.constant 0 : i32
    return %c0_i32, %arg0 : i32, i32
  }
  func.func @transform_3(%arg0: i32, %arg1: i32) -> (i32, i32) {
    %c0_i32 = arith.constant 0 : i32
    %c0_i32_0 = arith.constant 0 : i32
    return %c0_i32, %arg0 : i32, i32
  }
  func.func @transform_4(%arg0: i32, %arg1: i32) -> (i32, i32, i32) {
    %c0_i32 = arith.constant 0 : i32
    %c0_i32_0 = arith.constant 0 : i32
    return %arg1, %c0_i32, %arg0 : i32, i32, i32
  }
}

</mosaic_0001>

<llo_original>
// kernel: tpu_custom_call.1
$region0: #{tpu_custom_call.1}
  #allocation0 [shape = 'u32[]', space=smem, size = 0x4, offset = 0x4, fixed_abs, tag = 'smem constant byte address 0x4 - core index']
  #allocation1 [shape = 'u32[144,128]{1,0:T(1,128)}', space=vmem, size = 0x12000, scoped, tag = 'internal scratch']
  %s0 = inlined_call_operand.hbm [shape: f32[2,16,128], index: 0, kind: input, shape index: {}]
  %s1 = inlined_call_operand.hbm [shape: f32[2,128], index: 1, kind: input, shape index: {}]
  %s2 = inlined_call_operand.vmem [shape: f32[2,128], index: 2, kind: input, shape index: {}]
  %s3 = inlined_call_operand.vmem [shape: f32[1,128], index: 3, kind: input, shape index: {}]
  %s4 = inlined_call_operand.hbm [shape: f32[2,16,128], index: 4, kind: output, shape index: {}]
  %s5 = sld [smem:[#allocation0]]
  $region57: #{tpu_custom_call.1} parent=0
    _
  %s7 = ssub.s32 1, %s5
  %s8 = scalar_select 0, %s7, %s5
  $region1: #{tpu_custom_call.1} parent=0
    #allocation2 [shape = 'u8[16384]{0}', space=vmem, size = 0x4000, scoped, tag = 'input window, operand 0']
    #allocation3 [shape = 's32[2]{0}', space=sflag, size = 0x8, scoped, tag = 'scoped memory for tpu_custom_call.1']
    #allocation4 [shape = 's32[2]{0}', space=sflag, size = 0x8, scoped, tag = 'scoped memory for tpu_custom_call.1']
    #allocation5 [shape = 'u8[1024]{0}', space=vmem, size = 0x400, scoped, tag = 'input window, operand 1, single buffered']
    #allocation6 [shape = 's32[1]{0}', space=sflag, size = 0x4, scoped, tag = 'scoped memory for tpu_custom_call.1']
    #allocation7 [shape = 'u8[16384]{0}', space=vmem, size = 0x4000, scoped, tag = 'output window, operand 0']
    %9 = vsyncpa [#allocation3], 0
    %s10 = scalar_lea.sflag [#allocation3], 1
    %11 = vsyncpa %s10, 0
    %12 = vsyncpa [#allocation6], 0
    %13 = vsyncpa [#allocation4], 0
    %s14 = scalar_lea.sflag [#allocation4], 1
    %15 = vsyncpa %s14, 0
    loop: start=0, step=1, limit=4
    $region2: #{tpu_custom_call.1} parent=1 // loop_pre_header
      _
    $region3: #{tpu_custom_call.1} parent=1 // loop_header
      %s17 = sphi 0, %s21
      %p18 = scmp.ge.s32.totalorder %s17, 4
      %s24 = sphi 0, %s36
      %s25 = sphi 0, %s32
      %s26 = sphi 0, %s24
      %s27 = sphi 0, %s25
      %s28 = sphi 0, %s26
      %s29 = sphi 0, %s27
      %s41 = sphi 0, %s43
      %s44 = sphi 0, %s41
      %s45 = sphi 0, %s44
      %s61 = sphi 0, %s45
      %s67 = sphi 0, %s69
      %s70 = sphi 0, %s67
      %s71 = sphi 0, %s70
      %s87 = sphi 0, %s71
      %s93 = sphi 0, %s95
      %s96 = sphi 0, %s93
      %s97 = sphi 0, %s96
      %s113 = sphi 0, %s97
      %s119 = sphi 0, %s121
      %s122 = sphi 0, %s119
      %s123 = sphi 0, %s122
      %s139 = sphi 0, %s123
      %s147 = sphi 0, %s149
      %s150 = sphi 0, %s147
      %s151 = sphi 0, %s150
      %s167 = sphi 0, %s151
    $region4: #{tpu_custom_call.1} parent=1 // loop_header_branch
      %20 = sbr.rel (%p18) target = $region8
    $region5: #{tpu_custom_call.1} parent=1 // loop_body
      %s22 = ssub.s32 %s17, 1
      %s23 = ssub.s32 %s17, 2
      %s30 = sadd.s32 1, %s25
      %p31 = scmp.ge.s32.totalorder %s30, 2
      %s32 = scalar_select %p31, 0, %s30
      %s33 = sadd.s32 1, %s24
      %s34 = scalar_select %p31, %s33, %s24
      %p35 = scmp.ge.s32.totalorder %s34, 1
      %s36 = scalar_select %p35, 0, %s34
      %s37 = ssub.s32 %s25, %s32
      %s38 = ssub.s32 %s24, %s36
      %s39 = sor.u32 %s37, %s38
      %p40 = scmp.eq.s32.totalorder %s39, 0
      %s42 = sadd.s32 %s41, 1
      %s43 = scalar_select %p40, %s41, %s42
      %p46 = pneg %p40
      %p47 = scmp.eq.s32.totalorder %s17, 1
      %p48 = por %p46, %p47
      %p49 = scmp.ne.s32.totalorder %s41, %s44
      %p50 = scmp.eq.s32.totalorder %s17, 0
      %p51 = por %p49, %p50
      %p52 = scmp.ne.s32.totalorder %s41, %s44
      %p53 = scmp.eq.s32.totalorder %s22, 1
      %p54 = por %p52, %p53
      %p55 = scmp.ne.s32.totalorder %s44, %s45
      %p56 = scmp.eq.s32.totalorder %s22, 0
      %p57 = por %p55, %p56
      %p58 = scmp.ne.s32.totalorder %s44, %s45
      %p59 = scmp.eq.s32.totalorder %s23, 1
      %p60 = por %p58, %p59
      %p62 = scmp.ne.s32.totalorder %s45, %s61
      %p63 = scmp.eq.s32.totalorder %s23, 0
      %p64 = por %p62, %p63
      %s65 = ssub.s32 %s24, %s36
      %p66 = scmp.eq.s32.totalorder %s65, 0
      %s68 = sadd.s32 %s67, 1
      %s69 = scalar_select %p66, %s67, %s68
      %p72 = pneg %p66
      %p73 = scmp.eq.s32.totalorder %s17, 1
      %p74 = por %p72, %p73
      %p75 = scmp.ne.s32.totalorder %s67, %s70
      %p76 = scmp.eq.s32.totalorder %s17, 0
      %p77 = por %p75, %p76
      %p78 = scmp.ne.s32.totalorder %s67, %s70
      %p79 = scmp.eq.s32.totalorder %s22, 1
      %p80 = por %p78, %p79
      %p81 = scmp.ne.s32.totalorder %s70, %s71
      %p82 = scmp.eq.s32.totalorder %s22, 0
      %p83 = por %p81, %p82
      %p84 = scmp.ne.s32.totalorder %s70, %s71
      %p85 = scmp.eq.s32.totalorder %s23, 1
      %p86 = por %p84, %p85
      %p88 = scmp.ne.s32.totalorder %s71, %s87
      %p89 = scmp.eq.s32.totalorder %s23, 0
      %p90 = por %p88, %p89
      %s91 = ssub.s32 %s24, %s36
      %p92 = scmp.eq.s32.totalorder %s91, 0
      %s94 = sadd.s32 %s93, 1
      %s95 = scalar_select %p92, %s93, %s94
      %p98 = pneg %p92
      %p99 = scmp.eq.s32.totalorder %s17, 1
      %p100 = por %p98, %p99
      %p101 = scmp.ne.s32.totalorder %s93, %s96
      %p102 = scmp.eq.s32.totalorder %s17, 0
      %p103 = por %p101, %p102
      %p104 = scmp.ne.s32.totalorder %s93, %s96
      %p105 = scmp.eq.s32.totalorder %s22, 1
      %p106 = por %p104, %p105
      %p107 = scmp.ne.s32.totalorder %s96, %s97
      %p108 = scmp.eq.s32.totalorder %s22, 0
      %p109 = por %p107, %p108
      %p110 = scmp.ne.s32.totalorder %s96, %s97
      %p111 = scmp.eq.s32.totalorder %s23, 1
      %p112 = por %p110, %p111
      %p114 = scmp.ne.s32.totalorder %s97, %s113
      %p115 = scmp.eq.s32.totalorder %s23, 0
      %p116 = por %p114, %p115
      %s117 = ssub.s32 %s24, %s36
      %p118 = scmp.eq.s32.totalorder %s117, 0
      %s120 = sadd.s32 %s119, 1
      %s121 = scalar_select %p118, %s119, %s120
      %p124 = pneg %p118
      %p125 = scmp.eq.s32.totalorder %s17, 1
      %p126 = por %p124, %p125
      %p127 = scmp.ne.s32.totalorder %s119, %s122
      %p128 = scmp.eq.s32.totalorder %s17, 0
      %p129 = por %p127, %p128
      %p130 = scmp.ne.s32.totalorder %s119, %s122
      %p131 = scmp.eq.s32.totalorder %s22, 1
      %p132 = por %p130, %p131
      %p133 = scmp.ne.s32.totalorder %s122, %s123
      %p134 = scmp.eq.s32.totalorder %s22, 0
      %p135 = por %p133, %p134
      %p136 = scmp.ne.s32.totalorder %s122, %s123
      %p137 = scmp.eq.s32.totalorder %s23, 1
      %p138 = por %p136, %p137
      %p140 = scmp.ne.s32.totalorder %s123, %s139
      %p141 = scmp.eq.s32.totalorder %s23, 0
      %p142 = por %p140, %p141
      %s143 = ssub.s32 %s25, %s32
      %s144 = ssub.s32 %s24, %s36
      %s145 = sor.u32 %s143, %s144
      %p146 = scmp.eq.s32.totalorder %s145, 0
      %s148 = sadd.s32 %s147, 1
      %s149 = scalar_select %p146, %s147, %s148
      %p152 = pneg %p146
      %p153 = scmp.eq.s32.totalorder %s17, 1
      %p154 = por %p152, %p153
      %p155 = scmp.ne.s32.totalorder %s147, %s150
      %p156 = scmp.eq.s32.totalorder %s17, 0
      %p157 = por %p155, %p156
      %p158 = scmp.ne.s32.totalorder %s147, %s150
      %p159 = scmp.eq.s32.totalorder %s22, 1
      %p160 = por %p158, %p159
      %p161 = scmp.ne.s32.totalorder %s150, %s151
      %p162 = scmp.eq.s32.totalorder %s22, 0
      %p163 = por %p161, %p162
      %p164 = scmp.ne.s32.totalorder %s150, %s151
      %p165 = scmp.eq.s32.totalorder %s23, 1
      %p166 = por %p164, %p165
      %p168 = scmp.ne.s32.totalorder %s151, %s167
      %p169 = scmp.eq.s32.totalorder %s23, 0
      %p170 = por %p168, %p169
      %p171 = scmp.le.s32.totalorder 1, %s17
      %p172 = scmp.lt.s32.totalorder %s17, 3
      %p173 = pnand %p171, %p172
      %p174 = pneg %p173
      // Predicated region
      $region9: #{tpu_custom_call.1} parent=5 // pred_check
        _
      $region10: #{tpu_custom_call.1} parent=5 // pred_check_branch
        %176 = sbr.rel (%p173) target = $region12
      $region11: #{tpu_custom_call.1} parent=5 // pred_region
        %s177 = ssub.s32 %s17, 1
        // Predicated region
        $region13: #{tpu_custom_call.1} parent=11 // pred_check
          %p178 = pneg %p83
        $region14: #{tpu_custom_call.1} parent=11 // pred_check_branch
          %180 = sbr.rel (%p178) target = $region16
        $region15: #{tpu_custom_call.1} parent=11 // pred_region
          %s182 = ssub.s32 32, 32
          %183 = vsyncadd [#allocation6], %s182
          %s184 = smul.addr %s26, 32
          %s185 = scalar_lea.hbm %s1, %s184
          %s187 = sshll.u32 [#allocation5], 4
          %s188 = int_to_ptr.vmem [resolvable:$true] %s187
          %190 = dma.hbm_to_vmem [thread:$0]  %s185, 32, %s188, [#allocation6]
        $region16: #{tpu_custom_call.1} parent=11 // pred_fallthru
          _
        // Predicated region
        $region17: #{tpu_custom_call.1} parent=11 // pred_check
          %p191 = pneg %p109
        $region18: #{tpu_custom_call.1} parent=11 // pred_check_branch
          %193 = sbr.rel (%p191) target = $region20
        $region19: #{tpu_custom_call.1} parent=11 // pred_region
          %p194 = scmp.lt.s32.totalorder %s26, 0
          %s195 = scalar_select %p194, %s26, 0
          %s196 = smul.addr %s195, 2
          %s197 = scalar_lea.vmem %s2, %s196
        $region20: #{tpu_custom_call.1} parent=11 // pred_fallthru
          _
        // Predicated region
        $region21: #{tpu_custom_call.1} parent=11 // pred_check
          %p198 = pneg %p135
        $region22: #{tpu_custom_call.1} parent=11 // pred_check_branch
          %200 = sbr.rel (%p198) target = $region24
        $region23: #{tpu_custom_call.1} parent=11 // pred_region
          %p201 = scmp.lt.s32.totalorder %s26, 0
          %s202 = scalar_select %p201, %s26, 0
          %s203 = scalar_lea.vmem %s3, %s202
        $region24: #{tpu_custom_call.1} parent=11 // pred_fallthru
          _
      $region12: #{tpu_custom_call.1} parent=5 // pred_fallthru
        _
      %p204 = scmp.lt.s32.totalorder %s17, 2
      // Predicated region
      $region25: #{tpu_custom_call.1} parent=5 // pred_check
        %p205 = pneg %p204
      $region26: #{tpu_custom_call.1} parent=5 // pred_check_branch
        %207 = sbr.rel (%p205) target = $region28
      $region27: #{tpu_custom_call.1} parent=5 // pred_region
        // Predicated region
        $region29: #{tpu_custom_call.1} parent=27 // pred_check
          %p208 = pneg %p51
        $region30: #{tpu_custom_call.1} parent=27 // pred_check_branch
          %210 = sbr.rel (%p208) target = $region32
        $region31: #{tpu_custom_call.1} parent=27 // pred_region
          %s211 = sand.u32 %s41, 1
          %s212 = scalar_lea.sflag [#allocation3], %s211
          %s213 = sand.u32 %s41, 1
          %s214 = smul.addr %s213, 16
          %s215 = scalar_lea.vmem [#allocation2], %s214
          %s217 = ssub.s32 256, 256
          %218 = vsyncadd %s212, %s217
          %s219 = smul.addr %s25, 2
          %s220 = sadd.s32 %s24, %s219
          %s221 = smul.addr %s220, 128
          %s222 = scalar_lea.hbm %s0, %s221
          %s223 = sshll.u32 %s215, 4
          %s224 = int_to_ptr.vmem [resolvable:$true] %s223
          %229 = dma.hbm_to_vmem [thread:$0]  %s222, 256, %s224, %s212, 128, 128, 8
        $region32: #{tpu_custom_call.1} parent=27 // pred_fallthru
          _
      $region28: #{tpu_custom_call.1} parent=5 // pred_fallthru
        _
      %p230 = scmp.le.s32.totalorder 1, %s17
      %p231 = scmp.lt.s32.totalorder %s17, 3
      %p232 = pnand %p230, %p231
      %p233 = pneg %p232
      // Predicated region
      $region33: #{tpu_custom_call.1} parent=5 // pred_check
        _
      $region34: #{tpu_custom_call.1} parent=5 // pred_check_branch
        %235 = sbr.rel (%p232) target = $region36
      $region35: #{tpu_custom_call.1} parent=5 // pred_region
        %s236 = ssub.s32 %s17, 1
        %s237 = sand.u32 %s44, 1
        %s238 = scalar_lea.sflag [#allocation3], %s237
        %s239 = sand.u32 %s44, 1
        %s240 = smul.addr %s239, 16
        %s241 = scalar_lea.vmem [#allocation2], %s240
        // Predicated region
        $region37: #{tpu_custom_call.1} parent=35 // pred_check
          %p242 = pneg %p57
        $region38: #{tpu_custom_call.1} parent=35 // pred_check_branch
          %244 = sbr.rel (%p242) target = $region40
        $region39: #{tpu_custom_call.1} parent=35 // pred_region
          %245 = dma.done %s238, 256
        $region40: #{tpu_custom_call.1} parent=35 // pred_fallthru
          _
        // Predicated region
        $region41: #{tpu_custom_call.1} parent=35 // pred_check
          %p246 = pneg %p83
        $region42: #{tpu_custom_call.1} parent=35 // pred_check_branch
          %248 = sbr.rel (%p246) target = $region44
        $region43: #{tpu_custom_call.1} parent=35 // pred_region
          %249 = dma.done [#allocation6], 32
        $region44: #{tpu_custom_call.1} parent=35 // pred_fallthru
          _
        %s250 = sand.u32 %s44, 1
        %s251 = scalar_lea.sflag [#allocation3], %s250
        %s252 = sand.u32 %s44, 1
        %s253 = smul.addr %s252, 16
        %s254 = scalar_lea.vmem [#allocation2], %s253
        %p255 = pneg %p57
        %p256 = pneg %p54
        %p257 = pneg %p83
        %p258 = pneg %p80
        %p259 = scmp.lt.s32.totalorder %s26, 0
        %s260 = scalar_select %p259, %s26, 0
        %s261 = smul.addr %s260, 2
        %s262 = scalar_lea.vmem %s2, %s261
        %p263 = pneg %p109
        %p264 = pneg %p106
        %p265 = scmp.lt.s32.totalorder %s26, 0
        %s266 = scalar_select %p265, %s26, 0
        %s267 = scalar_lea.vmem %s3, %s266
        %p268 = pneg %p135
        %p269 = pneg %p132
        %p270 = pneg %p163
        %p271 = pneg %p160
        %s272 = sand.u32 %s150, 1
        %s273 = scalar_lea.sflag [#allocation4], %s272
        %s274 = sand.u32 %s150, 1
        %s275 = smul.addr %s274, 16
        %s276 = scalar_lea.vmem [#allocation7], %s275
        %p277 = scmp.lt.s32.totalorder %s26, 0
        %s278 = scalar_select %p277, %s26, 0
        %s279 = smul.addr %s278, 2
        %s280 = scalar_lea.vmem %s2, %s279
        %p281 = scmp.lt.s32.totalorder %s26, 0
        %s282 = scalar_select %p281, %s26, 0
        %s283 = scalar_lea.vmem %s3, %s282
        %v284 = vld [vmem:[%s241] sm:$0xff]
        %v285 = vld [vmem:[%s241 + $0x8] sm:$0xff]
        %v286 = vld [vmem:[#allocation5] sm:$0x3]
        %v287 = vld [vmem:[%s280] sm:$0x3]
        %v288 = vlaneseq
        %v289 = vshrl.u32 %v288, 7
        %v290 = vadd.s32 %v289, 8
        %v291 = vlaneseq
        %v292 = vshrl.u32 %v291, 7
        %v293 = vsub.s32 0, %v292
        %v294 = vrot.slane %v286, %v293
        %vm295 = vcmp.ge.s32.totalorder %v289, 1
        %vm296 = vcmp.ge.s32.totalorder %v290, 1
        %v297 = vrot.slane %v284, 7
        %v298 = vrot.slane %v285, 7
        %vm299 = vcmp.lt.s32.totalorder %v289, 1
        %v300 = vsel %vm299, %v297, %v298
        %v301 = vsel %vm299, %v298, %v297
        %v302 = vsel %vm295, %v301, 0.0
        %v303 = vsel %vm296, %v300, 0.0
        %v304 = vmul.f32 %v294, %v302
        %v305 = vmul.f32 %v294, %v303
        %v306 = vadd.f32 %v304, %v284
        %v307 = vadd.f32 %v305, %v285
        %v308 = vrot.slane %v294, 7
        %v309 = vsel %vm295, %v308, 1.0
        %v310 = vsel %vm296, %v308, 1.0
        %v311 = vmul.f32 %v294, %v309
        %v312 = vmul.f32 %v294, %v310
        %vm313 = vcmp.ge.s32.totalorder %v289, 2
        %vm314 = vcmp.ge.s32.totalorder %v290, 2
        %v315 = vrot.slane %v306, 6
        %v316 = vrot.slane %v307, 6
        %vm317 = vcmp.lt.s32.totalorder %v289, 2
        %v318 = vsel %vm317, %v315, %v316
        %v319 = vsel %vm317, %v316, %v315
        %v320 = vsel %vm313, %v319, 0.0
        %v321 = vsel %vm314, %v318, 0.0
        %v322 = vmul.f32 %v311, %v320
        %v323 = vmul.f32 %v312, %v321
        %v324 = vadd.f32 %v322, %v306
        %v325 = vadd.f32 %v323, %v307
        %v326 = vrot.slane %v311, 6
        %v327 = vrot.slane %v312, 6
        %v328 = vsel %vm317, %v326, %v327
        %v329 = vsel %vm317, %v327, %v326
        %v330 = vsel %vm313, %v329, 1.0
        %v331 = vsel %vm314, %v328, 1.0
        %v332 = vmul.f32 %v311, %v330
        %v333 = vmul.f32 %v312, %v331
        %vm334 = vcmp.ge.s32.totalorder %v289, 4
        %vm335 = vcmp.ge.s32.totalorder %v290, 4
        %v336 = vrot.slane %v324, 4
        %v337 = vrot.slane %v325, 4
        %vm338 = vcmp.lt.s32.totalorder %v289, 4
        %v339 = vsel %vm338, %v336, %v337
        %v340 = vsel %vm338, %v337, %v336
        %v341 = vsel %vm334, %v340, 0.0
        %v342 = vsel %vm335, %v339, 0.0
        %v343 = vmul.f32 %v332, %v341
        %v344 = vmul.f32 %v333, %v342
        %v345 = vadd.f32 %v343, %v324
        %v346 = vadd.f32 %v344, %v325
        %v347 = vrot.slane %v332, 4
        %v348 = vrot.slane %v333, 4
        %v349 = vsel %vm338, %v347, %v348
        %v350 = vsel %vm338, %v348, %v347
        %v351 = vsel %vm334, %v350, 1.0
        %v352 = vsel %vm335, %v349, 1.0
        %v353 = vmul.f32 %v332, %v351
        %v354 = vmul.f32 %v333, %v352
        %vm355 = vcmp.ge.s32.totalorder %v289, 8
        %vm356 = vcmp.ge.s32.totalorder %v290, 8
        %v357 = vsel %vm355, %v346, 0.0
        %v358 = vsel %vm356, %v345, 0.0
        %v359 = vmul.f32 %v353, %v357
        %v360 = vmul.f32 %v354, %v358
        %v361 = vadd.f32 %v359, %v345
        %v362 = vadd.f32 %v360, %v346
        %v363 = vlaneseq
        %v364 = vshrl.u32 %v363, 7
        %v365 = vsub.s32 0, %v364
        %v366 = vrot.slane %v287, %v365
        %v367 = vmul.f32 %v366, %v361
        %v368 = vmul.f32 %v366, %v362
        %v369 = vadd.f32 %v367, 0.0
        %v370 = vadd.f32 %v368, 0.0
        %v371 = vlaneseq
        %v372 = vshrl.u32 %v371, 7
        %v373 = vsub.s32 1, %v372
        %v374 = vrot.slane %v286, %v373
        %v375 = vmul.f32 %v374, %v302
        %v376 = vmul.f32 %v374, %v303
        %v377 = vadd.f32 %v375, %v284
        %v378 = vadd.f32 %v376, %v285
        %v379 = vrot.slane %v374, 7
        %v380 = vsel %vm295, %v379, 1.0
        %v381 = vsel %vm296, %v379, 1.0
        %v382 = vmul.f32 %v374, %v380
        %v383 = vmul.f32 %v374, %v381
        %v384 = vrot.slane %v377, 6
        %v385 = vrot.slane %v378, 6
        %v386 = vsel %vm317, %v384, %v385
        %v387 = vsel %vm317, %v385, %v384
        %v388 = vsel %vm313, %v387, 0.0
        %v389 = vsel %vm314, %v386, 0.0
        %v390 = vmul.f32 %v382, %v388
        %v391 = vmul.f32 %v383, %v389
        %v392 = vadd.f32 %v390, %v377
        %v393 = vadd.f32 %v391, %v378
        %v394 = vrot.slane %v382, 6
        %v395 = vrot.slane %v383, 6
        %v396 = vsel %vm317, %v394, %v395
        %v397 = vsel %vm317, %v395, %v394
        %v398 = vsel %vm313, %v397, 1.0
        %v399 = vsel %vm314, %v396, 1.0
        %v400 = vmul.f32 %v382, %v398
        %v401 = vmul.f32 %v383, %v399
        %v402 = vrot.slane %v392, 4
        %v403 = vrot.slane %v393, 4
        %v404 = vsel %vm338, %v402, %v403
        %v405 = vsel %vm338, %v403, %v402
        %v406 = vsel %vm334, %v405, 0.0
        %v407 = vsel %vm335, %v404, 0.0
        %v408 = vmul.f32 %v400, %v406
        %v409 = vmul.f32 %v401, %v407
        %v410 = vadd.f32 %v408, %v392
        %v411 = vadd.f32 %v409, %v393
        %v412 = vrot.slane %v400, 4
        %v413 = vrot.slane %v401, 4
        %v414 = vsel %vm338, %v412, %v413
        %v415 = vsel %vm338, %v413, %v412
        %v416 = vsel %vm334, %v415, 1.0
        %v417 = vsel %vm335, %v414, 1.0
        %v418 = vmul.f32 %v400, %v416
        %v419 = vmul.f32 %v401, %v417
        %v420 = vsel %vm355, %v411, 0.0
        %v421 = vsel %vm356, %v410, 0.0
        %v422 = vmul.f32 %v418, %v420
        %v423 = vmul.f32 %v419, %v421
        %v424 = vadd.f32 %v422, %v410
        %v425 = vadd.f32 %v423, %v411
        %v426 = vlaneseq
        %v427 = vshrl.u32 %v426, 7
        %v428 = vsub.s32 1, %v427
        %v429 = vrot.slane %v287, %v428
        %v430 = vmul.f32 %v429, %v424
        %v431 = vmul.f32 %v429, %v425
        %v432 = vadd.f32 %v369, %v430
        %v433 = vadd.f32 %v370, %v431
        %v434 = vld [vmem:[%s283] sm:$0x1]
        %v436 = vlaneseq
        %v437 = vshrl.u32 %v436, 7
        %v438 = vsub.s32 0, %v437
        %v439 = vrot.slane %v434, %v438
        %v441 = vmul.f32 %v284, %v439
        %v442 = vmul.f32 %v285, %v439
        %v443 = vadd.f32 %v432, %v441
        %v444 = vadd.f32 %v433, %v442
        %v445 = vxor.u32 %v443, 2147483648
        %v446 = vxor.u32 %v444, 2147483648
        %v447 = vmul.f32 %v445, 1.442695
        %v448 = vpow.pop %v447
        %v449 = vmul.f32 %v446, 1.442695
        %v450 = vpow.pop %v449
        %v451 = vadd.f32 %v448, 1.0
        %v452 = vadd.f32 %v450, 1.0
        %v453 = vrcp.pop %v451
        %v454 = vmul.f32 1.0, %v453
        %v455 = vrcp.pop %v452
        %v456 = vmul.f32 1.0, %v455
        %v457 = vmul.f32 %v443, %v454
        %v458 = vmul.f32 %v444, %v456
        %459 = vst [vmem:[%s276] sm:$0xff] %v457
        %460 = vst [vmem:[%s276 + $0x8] sm:$0xff] %v458
        %s461 = sand.u32 %s150, 1
        %s462 = scalar_lea.sflag [#allocation4], %s461
        %s463 = sand.u32 %s150, 1
        %s464 = smul.addr %s463, 16
        %s465 = scalar_lea.vmem [#allocation7], %s464
        // Predicated region
        $region45: #{tpu_custom_call.1} parent=35 // pred_check
          %p466 = pneg %p160
        $region46: #{tpu_custom_call.1} parent=35 // pred_check_branch
          %468 = sbr.rel (%p466) target = $region48
        $region47: #{tpu_custom_call.1} parent=35 // pred_region
          %s470 = ssub.s32 256, 256
          %471 = vsyncadd %s462, %s470
          %s472 = smul.addr %s27, 2
          %s473 = sadd.s32 %s26, %s472
          %s474 = smul.addr %s473, 128
          %s475 = scalar_lea.hbm %s4, %s474
          %s476 = sshll.u32 %s465, 4
          %s477 = int_to_ptr.vmem [resolvable:$true] %s476
          %482 = dma.vmem_to_hbm [thread:$0]  %s477, 256, %s475, %s462, 128, 128, 8
        $region48: #{tpu_custom_call.1} parent=35 // pred_fallthru
          _
      $region36: #{tpu_custom_call.1} parent=5 // pred_fallthru
        _
      %p483 = scmp.le.s32.totalorder 2, %s17
      // Predicated region
      $region49: #{tpu_custom_call.1} parent=5 // pred_check
        %p484 = pneg %p483
      $region50: #{tpu_custom_call.1} parent=5 // pred_check_branch
        %486 = sbr.rel (%p484) target = $region52
      $region51: #{tpu_custom_call.1} parent=5 // pred_region
        %s487 = ssub.s32 %s17, 2
        // Predicated region
        $region53: #{tpu_custom_call.1} parent=51 // pred_check
          %p488 = pneg %p166
        $region54: #{tpu_custom_call.1} parent=51 // pred_check_branch
          %490 = sbr.rel (%p488) target = $region56
        $region55: #{tpu_custom_call.1} parent=51 // pred_region
          %s491 = sand.u32 %s151, 1
          %s492 = scalar_lea.sflag [#allocation4], %s491
          %s493 = sand.u32 %s151, 1
          %s494 = smul.addr %s493, 16
          %s495 = scalar_lea.vmem [#allocation7], %s494
          %496 = dma.done %s492, 256
        $region56: #{tpu_custom_call.1} parent=51 // pred_fallthru
          _
      $region52: #{tpu_custom_call.1} parent=5 // pred_fallthru
        _
    $region6: #{tpu_custom_call.1} parent=1 // loop_footer
      %s21 = sadd.s32 1, %s17
    $region7: #{tpu_custom_call.1} parent=1 // loop_footer_branch
      %16 = sbr.rel target = $region3
    $region8: #{tpu_custom_call.1} parent=1 // loop_exit
      _
    %497 = vsyncpa [#allocation3], 1
    %s498 = scalar_lea.sflag [#allocation3], 1
    %499 = vsyncpa %s498, 1
    %500 = vsyncpa [#allocation6], 1
    %501 = vsyncpa [#allocation4], 1
    %s502 = scalar_lea.sflag [#allocation4], 1
    %503 = vsyncpa %s502, 1

</llo_original>
